<compile_context>
chip_gen: v6e
topology: v6e:2x2x1
jax: 0.10.0
libtpu: 0.0.40
codegen_flags: <defaults>
</compile_context>

<pallas_src>
import jax
import jax.numpy as jnp
import numpy as np
from jax import lax
from jax.experimental import pallas as pl
from jax.experimental.pallas import tpu as pltpu


def _make_focal_kernel(gamma, n_valid, n_classes, tiles_per_core, tile_n, has_ragged):
    """Builds the kernel with all static config baked in via closure."""
    gamma = float(gamma)

    def kernel(logits_ref, tgt_ref, w_ref, out_ref, acc_ref):
        i = pl.program_id(1)                      # per-core row-tile loop (reduction)

        @pl.when(i == 0)
        def _():
            acc_ref[...] = jnp.zeros_like(acc_ref)

        block = pl.program_id(0) * tiles_per_core + i          # logical block index
        row_start = block * tile_n                             # logical first row

        def accumulate(mask_rows):
            x = logits_ref[...].astype(jnp.float32)            # (TN, C)
            if mask_rows:
                row_ids = row_start + lax.broadcasted_iota(jnp.int32, (tile_n, 1), 0)
                valid = row_ids < n_valid                      # (TN, 1) bool
                # Mask BEFORE exp so garbage boundary rows can't produce NaN/Inf.
                x = jnp.where(valid, x, 0.0)

            # Stable log-softmax pieces: the single full-width exp pass (EUP).
            m = jnp.max(x, axis=-1, keepdims=True)             # (TN, 1)
            z = x - m                                          # (TN, C)
            lse = jnp.log(jnp.sum(jnp.exp(z), axis=-1, keepdims=True))  # (TN, 1)

            # Masked-select gather of the target column (no materialized one-hot).
            tgt = tgt_ref[...]                                 # (TN, 1) int32
            iota = lax.broadcasted_iota(jnp.int32, (tile_n, n_classes), 1)
            z_t = jnp.sum(jnp.where(iota == tgt, z, 0.0), axis=-1, keepdims=True)

            logp_t = z_t - lse                                 # (TN, 1)
            p_t = jnp.exp(logp_t)                              # (TN, 1)
            if gamma == 2.0:
                focal = jnp.square(1.0 - p_t)                  # VPU mul, no pow
            else:
                focal = jnp.maximum(1.0 - p_t, 0.0) ** gamma   # clamp: no NaN from pow

            loss_rows = -w_ref[...] * focal * logp_t           # (TN, 1)
            if mask_rows:
                # where-select (not multiply) so garbage NaN/Inf rows cannot leak.
                loss_rows = jnp.where(valid, loss_rows, 0.0)
            acc_ref[...] += loss_rows

        if has_ragged:
            tile_full = row_start + tile_n <= n_valid          # traced scalar bool
            @pl.when(tile_full)
            def _():
                accumulate(False)                              # interior fast path

            @pl.when(jnp.logical_not(tile_full))
            def _():
                accumulate(True)                               # ragged / duplicated tile
        else:
            accumulate(False)

        @pl.when(i == tiles_per_core - 1)
        def _():
            # Single cross-sublane reduce per core; lane-dense full-block store.
            total = jnp.sum(acc_ref[...])
            out_ref[...] = jnp.full(out_ref.shape, total, dtype=out_ref.dtype)

    return kernel


def _chip_config():
    """(num_cores, tile_budget_bytes, vmem_limit_cap_bytes) derived from the chip."""
    vmem_cap = None
    try:
        vmem_cap = int(pltpu.get_tpu_info().vmem_capacity_bytes)
    except Exception:
        vmem_cap = None
    kind = ""
    try:
        kind = jax.devices()[0].device_kind.lower()
    except Exception:
        pass
    is_v7 = ("v7" in kind) or ("tpu7" in kind)
    if vmem_cap is None:
        vmem_cap = (64 << 20) if is_v7 else (128 << 20)

    if vmem_cap >= (100 << 20):        # v5e / v6e: 128 MiB VMEM per TensorCore
        tile_budget = 64 << 20
        vmem_cap_limit = 96 << 20
    else:                              # v7x-like: 64 MiB VMEM per TensorCore
        tile_budget = 24 << 20
        vmem_cap_limit = 56 << 20

    # Single TensorCore on v5e/v6e: no core-split axis padding/overhead there.
    # TODO(synk): on v7x confirm with xprof that the leading "parallel" axis actually
    # shards across both TensorCores; if one core is idle switch to
    # pltpu.CORE_PARALLEL / pl.core_map(create_tensorcore_mesh(...)).
    num_cores = 2 if is_v7 else 1
    return num_cores, tile_budget, vmem_cap_limit


def focal_loss(logits, targets, class_weight=None, *, gamma=2.0, tile_n=None,
               num_cores=None):
    """logits: (N, C) float, targets: (N,) int, class_weight: (C,) float or None."""
    N, C = logits.shape
    targets = targets.astype(jnp.int32)

    # Pre-gather per-row class weights and the PyTorch weighted-mean denominator in
    # the wrapper (cheap (N,) gather); the kernel never sees the (C,) weight table.
    if class_weight is None:
        w_row = jnp.ones((N,), dtype=jnp.float32)
    else:
        w_row = class_weight.astype(jnp.float32)[targets]
    denom = jnp.sum(w_row)

    auto_cores, tile_budget, vmem_cap_limit = _chip_config()
    if num_cores is None:
        num_cores = auto_cores

    itemsize = jnp.dtype(logits.dtype).itemsize
    row_align = {4: 8, 2: 16, 1: 32}.get(itemsize, 8)

    # Per-row VMEM footprint: double-buffered logits block, two lane-padded (TN, 1)
    # narrow blocks (targets + w_row: 128 lanes * 4 B each, x2 buffers), the (TN, 1)
    # accumulator, and ~6 full-width f32 temporaries.
    per_row = 2 * C * itemsize + 2 * 2 * 128 * 4 + 128 * 4 + 6 * C * 4
    if tile_n is None:
        tile_n = (tile_budget // per_row) // row_align * row_align
        tile_n = int(max(row_align, min(1024, tile_n)))
    # Don't make tiles bigger than the per-core problem.
    rows_per_core = pl.cdiv(N, num_cores)
    tile_n = min(int(tile_n), pl.cdiv(rows_per_core, row_align) * row_align)
    tile_n = int(max(tile_n, row_align))

    total_tiles = pl.cdiv(N, tile_n)
    num_cores = int(max(1, min(num_cores, total_tiles)))
    tiles_per_core = int(pl.cdiv(total_tiles, num_cores))
    has_ragged = (num_cores * tiles_per_core * tile_n) != N

    # Deeper logits buffering only for large-C / small-tile configs on v7x-like chips.
    deep_buffer = (vmem_cap_limit <= (56 << 20)) and (tile_n <= 64) and (C >= 1024)
    logits_buffers = 3 if deep_buffer else 2

    vmem_est = (tile_n * (logits_buffers * C * itemsize      # logits block buffers
                          + 2 * 2 * 128 * 4                  # tgt + w narrow blocks
                          + 128 * 4                          # accumulator scratch
                          + 6 * C * 4)                       # f32 working temporaries
                + 2 * 2 * 8 * 128 * 4                        # output blocks
                + (1 << 16))
    vmem_limit = int(min(vmem_cap_limit, max(16 << 20, 2 * vmem_est)))

    kernel = _make_focal_kernel(gamma, N, C, tiles_per_core, tile_n, has_ragged)

    tpc = tiles_per_core
    last_blk = int(total_tiles) - 1

    def blk_idx(c, i):
        # Clamp so a 2-core split with an odd tile count never DMA's out of bounds;
        # duplicated blocks contribute zero via the row-validity mask in-kernel.
        return (jnp.minimum(c * tpc + i, last_blk), 0)

    logits_spec_kwargs = {}
    if logits_buffers == 3:
        logits_spec_kwargs["pipeline_mode"] = pl.Buffered(3)

    out = pl.pallas_call(
        kernel,
        out_shape=jax.ShapeDtypeStruct((num_cores, 8, 128), jnp.float32),
        grid_spec=pltpu.PrefetchScalarGridSpec(
            num_scalar_prefetch=0,
            grid=(num_cores, tpc),
            in_specs=[
                # logits tile for this (core, step)
                pl.BlockSpec((tile_n, C), blk_idx, **logits_spec_kwargs),
                # targets: small per-step block (NOT resident), hidden by the pipeline
                pl.BlockSpec((tile_n, 1), blk_idx),
                # pre-gathered per-row class weights: small per-step block
                pl.BlockSpec((tile_n, 1), blk_idx),
            ],
            out_specs=pl.BlockSpec((1, 8, 128), lambda c, i: (c, 0, 0)),
            scratch_shapes=[
                pltpu.VMEM((tile_n, 1), jnp.float32),   # running per-row weighted loss
            ],
        ),
        compiler_params=pltpu.CompilerParams(
            dimension_semantics=("parallel", "arbitrary"),
            vmem_limit_bytes=vmem_limit,
        ),
    )(logits, targets.reshape(N, 1), w_row.reshape(N, 1))

    loss_sum = jnp.sum(out[:, 0, 0])
    return loss_sum / denom


def _focal_loss_ref(logits, targets, class_weight, gamma=2.0):
    logp = jax.nn.log_softmax(logits.astype(jnp.float32), axis=-1)
    p = jnp.exp(logp)
    focal = ((1.0 - p) ** gamma) * logp
    picked = jnp.take_along_axis(focal, targets[:, None], axis=-1)[:, 0]
    w_t = class_weight[targets]
    return jnp.sum(-w_t * picked) / jnp.sum(w_t)


if __name__ == "__main__":
    key = jax.random.PRNGKey(0)
    k1, k2, k3, k4 = jax.random.split(key, 4)

    # Small shapes consistent with the module: (N samples, C classes).
    N, C = 16, 32
    logits = jax.random.normal(k1, (N, C), dtype=jnp.float32)
    targets = jax.random.randint(k2, (N,), 0, C, dtype=jnp.int32)
    class_weight = 0.5 + 0.05 * jnp.arange(C, dtype=jnp.float32)

    loss = jax.block_until_ready(focal_loss(logits, targets, class_weight))
    ref = _focal_loss_ref(logits, targets, class_weight)
    np.testing.assert_allclose(np.asarray(loss), np.asarray(ref), rtol=1e-5, atol=1e-5)

    # Ragged N (not a multiple of the tile) exercises the in-kernel masked last tile.
    N2 = 13
    logits2 = jax.random.normal(k3, (N2, C), dtype=jnp.float32)
    targets2 = jax.random.randint(k4, (N2,), 0, C, dtype=jnp.int32)
    loss2 = jax.block_until_ready(focal_loss(logits2, targets2, class_weight))
    ref2 = _focal_loss_ref(logits2, targets2, class_weight)
    np.testing.assert_allclose(np.asarray(loss2), np.asarray(ref2), rtol=1e-5, atol=1e-5)

    # weight=None (plain mean) path.
    loss3 = jax.block_until_ready(focal_loss(logits, targets, None))
    ref3 = _focal_loss_ref(logits, targets, jnp.ones((C,), jnp.float32))
    np.testing.assert_allclose(np.asarray(loss3), np.asarray(ref3), rtol=1e-5, atol=1e-5)

    print("KERNEL_OK")
</pallas_src>

<mosaic_0001>
module attributes {stable_mosaic.version = 11 : i64} {
  func.func @kernel(%arg0: i32, %arg1: i32, %arg2: memref<16x32xf32, #tpu.memory_space<vmem>>, %arg3: memref<16x1xi32, #tpu.memory_space<vmem>>, %arg4: memref<16x1xf32, #tpu.memory_space<vmem>>, %arg5: memref<1x8x128xf32, #tpu.memory_space<vmem>>, %arg6: memref<16x1xf32, #tpu.memory_space<vmem>>) attributes {dimension_semantics = [#tpu.dimension_semantics<parallel>, #tpu.dimension_semantics<arbitrary>], iteration_bounds = array<i64: 1, 1>, scalar_prefetch = 0 : i64, scratch_operands = 1 : i64, tpu.core_type = #tpu.core_type<tc>, window_params = [{transform_indices = @transform_0, window_bounds = array<i64: 16, 32>}, {transform_indices = @transform_1, window_bounds = array<i64: 16, 1>}, {transform_indices = @transform_2, window_bounds = array<i64: 16, 1>}, {transform_indices = @transform_3, window_bounds = array<i64: 1, 8, 128>}]} {
    %c0_i32 = arith.constant 0 : i32
    %0 = arith.cmpi eq, %arg1, %c0_i32 : i32
    %1 = arith.extui %0 : i1 to i32
    %c0_i32_0 = arith.constant 0 : i32
    %2 = arith.cmpi ne, %1, %c0_i32_0 : i32
    scf.if %2 {
      %cst_17 = arith.constant 0.000000e+00 : f32
      %36 = vector.broadcast %cst_17 : f32 to vector<16x1xf32>
      %c0_18 = arith.constant 0 : index
      %c0_19 = arith.constant 0 : index
      %37 = vector.load %arg6[%c0_18, %c0_19] : memref<16x1xf32, #tpu.memory_space<vmem>>, vector<16x1xf32>
      tpu.vector_store %arg6[%c0_18, %c0_19], %36 {strides = array<i32>} : memref<16x1xf32, #tpu.memory_space<vmem>>, vector<16x1xf32>,
    } else {
    }
    %c0 = arith.constant 0 : index
    %c0_1 = arith.constant 0 : index
    %3 = vector.load %arg2[%c0, %c0_1] : memref<16x32xf32, #tpu.memory_space<vmem>>, vector<16x32xf32>
    %cst = arith.constant dense<0xFF800000> : vector<16xf32>
    %4 = vector.multi_reduction <maximumf>, %3, %cst [1] : vector<16x32xf32> to vector<16xf32>
    %5 = vector.shape_cast %4 : vector<16xf32> to vector<16x1xf32>
    %6 = vector.broadcast %5 : vector<16x1xf32> to vector<16x32xf32>
    %7 = arith.subf %3, %6 : vector<16x32xf32>
    %8 = math.exp %7 : vector<16x32xf32>
    %cst_2 = arith.constant dense<0.000000e+00> : vector<16xf32>
    %9 = vector.multi_reduction <add>, %8, %cst_2 [1] : vector<16x32xf32> to vector<16xf32>
    %10 = vector.shape_cast %9 : vector<16xf32> to vector<16x1xf32>
    %11 = math.log %10 : vector<16x1xf32>
    %c0_3 = arith.constant 0 : index
    %c0_4 = arith.constant 0 : index
    %12 = vector.load %arg3[%c0_3, %c0_4] : memref<16x1xi32, #tpu.memory_space<vmem>>, vector<16x1xi32>
    %13 = tpu.iota {dimensions = array<i32: 1>} : vector<16x32xi32>
    %14 = vector.broadcast %12 : vector<16x1xi32> to vector<16x32xi32>
    %15 = arith.cmpi eq, %13, %14 : vector<16x32xi32>
    %cst_5 = arith.constant 0.000000e+00 : f32
    %16 = vector.broadcast %cst_5 : f32 to vector<16x32xf32>
    %17 = arith.select %15, %7, %16 : vector<16x32xi1>, vector<16x32xf32>
    %cst_6 = arith.constant dense<0.000000e+00> : vector<16xf32>
    %18 = vector.multi_reduction <add>, %17, %cst_6 [1] : vector<16x32xf32> to vector<16xf32>
    %19 = vector.shape_cast %18 : vector<16xf32> to vector<16x1xf32>
    %20 = arith.subf %19, %11 : vector<16x1xf32>
    %21 = math.exp %20 : vector<16x1xf32>
    %cst_7 = arith.constant 1.000000e+00 : f32
    %22 = vector.broadcast %cst_7 : f32 to vector<16x1xf32>
    %23 = arith.subf %22, %21 : vector<16x1xf32>
    %24 = arith.mulf %23, %23 : vector<16x1xf32>
    %c0_8 = arith.constant 0 : index
    %c0_9 = arith.constant 0 : index
    %25 = vector.load %arg4[%c0_8, %c0_9] : memref<16x1xf32, #tpu.memory_space<vmem>>, vector<16x1xf32>
    %cst_10 = arith.constant 0.000000e+00 : f32
    %26 = vector.broadcast %cst_10 : f32 to vector<16x1xf32>
    %27 = arith.subf %26, %25 : vector<16x1xf32>
    %28 = arith.mulf %27, %24 : vector<16x1xf32>
    %29 = arith.mulf %28, %20 : vector<16x1xf32>
    %c0_11 = arith.constant 0 : index
    %c0_12 = arith.constant 0 : index
    %30 = vector.load %arg6[%c0_11, %c0_12] : memref<16x1xf32, #tpu.memory_space<vmem>>, vector<16x1xf32>
    %31 = arith.addf %30, %29 : vector<16x1xf32>
    %c0_13 = arith.constant 0 : index
    %c0_14 = arith.constant 0 : index
    %32 = vector.load %arg6[%c0_13, %c0_14] : memref<16x1xf32, #tpu.memory_space<vmem>>, vector<16x1xf32>
    tpu.vector_store %arg6[%c0_13, %c0_14], %31 {strides = array<i32>} : memref<16x1xf32, #tpu.memory_space<vmem>>, vector<16x1xf32>,
    %c0_i32_15 = arith.constant 0 : i32
    %33 = arith.cmpi eq, %arg1, %c0_i32_15 : i32
    %34 = arith.extui %33 : i1 to i32
    %c0_i32_16 = arith.constant 0 : i32
    %35 = arith.cmpi ne, %34, %c0_i32_16 : i32
    scf.if %35 {
      %c0_17 = arith.constant 0 : index
      %c0_18 = arith.constant 0 : index
      %36 = vector.load %arg6[%c0_17, %c0_18] : memref<16x1xf32, #tpu.memory_space<vmem>>, vector<16x1xf32>
      %37 = vector.shape_cast %36 : vector<16x1xf32> to vector<1x16x1xf32>
      %cst_19 = arith.constant dense<0.000000e+00> : vector<1xf32>
      %38 = vector.multi_reduction <add>, %37, %cst_19 [1, 2] : vector<1x16x1xf32> to vector<1xf32>
      %39 = vector.shape_cast %38 : vector<1xf32> to vector<1x1x1xf32>
      %40 = vector.extract %39[0, 0, 0] : f32 from vector<1x1x1xf32>
      %41 = vector.broadcast %40 : f32 to vector<1x8x128xf32>
      %c0_20 = arith.constant 0 : index
      %c0_21 = arith.constant 0 : index
      %c0_22 = arith.constant 0 : index
      %42 = vector.load %arg5[%c0_20, %c0_21, %c0_22] : memref<1x8x128xf32, #tpu.memory_space<vmem>>, vector<1x8x128xf32>
      tpu.vector_store %arg5[%c0_20, %c0_21, %c0_22], %41 {strides = array<i32>} : memref<1x8x128xf32, #tpu.memory_space<vmem>>, vector<1x8x128xf32>,
    } else {
    }
    return
  }
  func.func @transform_0(%arg0: i32, %arg1: i32) -> (i32, i32) {
    %c1_i32 = arith.constant 1 : i32
    %0 = arith.muli %arg0, %c1_i32 : i32
    %1 = arith.addi %0, %arg1 : i32
    %c0_i32 = arith.constant 0 : i32
    %2 = arith.minsi %1, %c0_i32 : i32
    %c0_i32_0 = arith.constant 0 : i32
    %c0_i32_1 = arith.constant 0 : i32
    return %2, %c0_i32_0 : i32, i32
  }
  func.func @transform_1(%arg0: i32, %arg1: i32) -> (i32, i32) {
    %c1_i32 = arith.constant 1 : i32
    %0 = arith.muli %arg0, %c1_i32 : i32
    %1 = arith.addi %0, %arg1 : i32
    %c0_i32 = arith.constant 0 : i32
    %2 = arith.minsi %1, %c0_i32 : i32
    %c0_i32_0 = arith.constant 0 : i32
    %c0_i32_1 = arith.constant 0 : i32
    return %2, %c0_i32_0 : i32, i32
  }
  func.func @transform_2(%arg0: i32, %arg1: i32) -> (i32, i32) {
    %c1_i32 = arith.constant 1 : i32
    %0 = arith.muli %arg0, %c1_i32 : i32
    %1 = arith.addi %0, %arg1 : i32
    %c0_i32 = arith.constant 0 : i32
    %2 = arith.minsi %1, %c0_i32 : i32
    %c0_i32_0 = arith.constant 0 : i32
    %c0_i32_1 = arith.constant 0 : i32
    return %2, %c0_i32_0 : i32, i32
  }
  func.func @transform_3(%arg0: i32, %arg1: i32) -> (i32, i32, i32) {
    %c0_i32 = arith.constant 0 : i32
    %c0_i32_0 = arith.constant 0 : i32
    %c0_i32_1 = arith.constant 0 : i32
    return %arg0, %c0_i32, %c0_i32_0 : i32, i32, i32
  }
}

</mosaic_0001>

<llo_original>
// kernel: tpu_custom_call.1
$region0: #{tpu_custom_call.1}
  #allocation0 [shape = 'u32[]', space=smem, size = 0x4, offset = 0x4, fixed_abs, tag = 'smem constant byte address 0x4 - core index']
  #allocation1 [shape = 'u32[144,128]{1,0:T(1,128)}', space=vmem, size = 0x12000, scoped, tag = 'internal scratch']
  #allocation2 [shape = 'f32[16,1]{1,0:T(8,128)}', space=vmem, size = 0x2000, scoped, tag = 'scratch operand']
  %s0 = inlined_call_operand.vmem [shape: f32[16,32], index: 0, kind: input, shape index: {}]
  %s1 = inlined_call_operand.vmem [shape: s32[16,1], index: 1, kind: input, shape index: {}]
  %s2 = inlined_call_operand.vmem [shape: f32[16,1], index: 2, kind: input, shape index: {}]
  %s3 = inlined_call_operand.hbm [shape: f32[1,8,128], index: 3, kind: output, shape index: {}]
  %s4 = sld [smem:[#allocation0]]
  $region30: #{tpu_custom_call.1} parent=0
    _
  %s6 = ssub.s32 1, %s4
  %s7 = scalar_select 0, %s6, %s4
  $region1: #{tpu_custom_call.1} parent=0
    #allocation3 [shape = 'u8[4096]{0}', space=vmem, size = 0x1000, scoped, tag = 'output window, operand 0, single buffered']
    #allocation4 [shape = 's32[1]{0}', space=sflag, size = 0x4, scoped, tag = 'scoped memory for tpu_custom_call.1']
    %8 = vsyncpa [#allocation4], 0
    // Predicated region
    $region2: #{tpu_custom_call.1} parent=1 // pred_check
      _
    $region3: #{tpu_custom_call.1} parent=1 // pred_check_branch
      %10 = sbr.rel (0) target = $region5
    $region4: #{tpu_custom_call.1} parent=1 // pred_region
      %s11 = sadd.s32 0, 0
      %p12 = scmp.lt.s32.totalorder %s11, 0
      %s13 = scalar_select %p12, %s11, 0
      %s14 = smul.u32 2, %s13
      %p15 = scmp.lt.s32.totalorder %s14, 1
      %s16 = scalar_select %p15, %s14, 1
      %s17 = smul.addr %s16, 8
      %s18 = scalar_lea.vmem %s0, %s17
      %s19 = sadd.s32 0, 0
      %p20 = scmp.lt.s32.totalorder %s19, 0
      %s21 = scalar_select %p20, %s19, 0
      %s22 = smul.u32 2, %s21
    $region5: #{tpu_custom_call.1} parent=1 // pred_fallthru
      _
    // Predicated region
    $region6: #{tpu_custom_call.1} parent=1 // pred_check
      _
    $region7: #{tpu_custom_call.1} parent=1 // pred_check_branch
      %24 = sbr.rel (0) target = $region9
    $region8: #{tpu_custom_call.1} parent=1 // pred_region
      %s25 = sadd.s32 0, 0
      %p26 = scmp.lt.s32.totalorder %s25, 0
      %s27 = scalar_select %p26, %s25, 0
      %s28 = smul.u32 2, %s27
      %p29 = scmp.lt.s32.totalorder %s28, 1
      %s30 = scalar_select %p29, %s28, 1
      %s31 = smul.addr %s30, 8
      %s32 = scalar_lea.vmem %s1, %s31
      %s33 = sadd.s32 0, 0
      %p34 = scmp.lt.s32.totalorder %s33, 0
      %s35 = scalar_select %p34, %s33, 0
      %s36 = smul.u32 2, %s35
    $region9: #{tpu_custom_call.1} parent=1 // pred_fallthru
      _
    // Predicated region
    $region10: #{tpu_custom_call.1} parent=1 // pred_check
      _
    $region11: #{tpu_custom_call.1} parent=1 // pred_check_branch
      %38 = sbr.rel (0) target = $region13
    $region12: #{tpu_custom_call.1} parent=1 // pred_region
      %s39 = sadd.s32 0, 0
      %p40 = scmp.lt.s32.totalorder %s39, 0
      %s41 = scalar_select %p40, %s39, 0
      %s42 = smul.u32 2, %s41
      %p43 = scmp.lt.s32.totalorder %s42, 1
      %s44 = scalar_select %p43, %s42, 1
      %s45 = smul.addr %s44, 8
      %s46 = scalar_lea.vmem %s2, %s45
      %s47 = sadd.s32 0, 0
      %p48 = scmp.lt.s32.totalorder %s47, 0
      %s49 = scalar_select %p48, %s47, 0
      %s50 = smul.u32 2, %s49
    $region13: #{tpu_custom_call.1} parent=1 // pred_fallthru
      _
    %s51 = sadd.s32 0, 0
    %p52 = scmp.lt.s32.totalorder %s51, 0
    %s53 = scalar_select %p52, %s51, 0
    %s54 = smul.u32 2, %s53
    %p55 = scmp.lt.s32.totalorder %s54, 1
    %s56 = scalar_select %p55, %s54, 1
    %s57 = smul.addr %s56, 8
    %s58 = scalar_lea.vmem %s0, %s57
    %s59 = sadd.s32 0, 0
    %p60 = scmp.lt.s32.totalorder %s59, 0
    %s61 = scalar_select %p60, %s59, 0
    %s62 = smul.u32 2, %s61
    %p63 = scmp.lt.s32.totalorder %s62, 1
    %s64 = scalar_select %p63, %s62, 1
    %s65 = smul.addr %s64, 8
    %s66 = scalar_lea.vmem %s1, %s65
    %s67 = sadd.s32 0, 0
    %p68 = scmp.lt.s32.totalorder %s67, 0
    %s69 = scalar_select %p68, %s67, 0
    %s70 = smul.u32 2, %s69
    %p71 = scmp.lt.s32.totalorder %s70, 1
    %s72 = scalar_select %p71, %s70, 1
    %s73 = smul.addr %s72, 8
    %s74 = scalar_lea.vmem %s2, %s73
    %s75 = sadd.s32 0, 0
    %p76 = scmp.lt.s32.totalorder %s75, 0
    %s77 = scalar_select %p76, %s75, 0
    %s78 = smul.u32 2, %s77
    %p79 = scmp.lt.s32.totalorder %s78, 1
    %s80 = scalar_select %p79, %s78, 1
    %s81 = smul.addr %s80, 8
    %s82 = scalar_lea.vmem %s0, %s81
    %s83 = sadd.s32 0, 0
    %p84 = scmp.lt.s32.totalorder %s83, 0
    %s85 = scalar_select %p84, %s83, 0
    %s86 = smul.u32 2, %s85
    %s87 = sadd.s32 0, 0
    %p88 = scmp.lt.s32.totalorder %s87, 0
    %s89 = scalar_select %p88, %s87, 0
    %s90 = smul.u32 2, %s89
    %p91 = scmp.lt.s32.totalorder %s90, 1
    %s92 = scalar_select %p91, %s90, 1
    %s93 = smul.addr %s92, 8
    %s94 = scalar_lea.vmem %s1, %s93
    %s95 = sadd.s32 0, 0
    %p96 = scmp.lt.s32.totalorder %s95, 0
    %s97 = scalar_select %p96, %s95, 0
    %s98 = smul.u32 2, %s97
    %s99 = sadd.s32 0, 0
    %p100 = scmp.lt.s32.totalorder %s99, 0
    %s101 = scalar_select %p100, %s99, 0
    %s102 = smul.u32 2, %s101
    %p103 = scmp.lt.s32.totalorder %s102, 1
    %s104 = scalar_select %p103, %s102, 1
    %s105 = smul.addr %s104, 8
    %s106 = scalar_lea.vmem %s2, %s105
    %s107 = sadd.s32 0, 0
    %p108 = scmp.lt.s32.totalorder %s107, 0
    %s109 = scalar_select %p108, %s107, 0
    %s110 = smul.u32 2, %s109
    %p111 = scmp.eq.s32.totalorder 0, 0
    // Predicated region
    $region14: #{tpu_custom_call.1} parent=1 // pred_check
      %p112 = pneg %p111
    $region15: #{tpu_custom_call.1} parent=1 // pred_check_branch
      %114 = sbr.rel (%p112) target = $region17
    $region16: #{tpu_custom_call.1} parent=1 // pred_region
      %vm115 = vcmask 7168
      %116 = vst.msk [vmem:[#allocation2] sm:$0xff] %vm115, 0.0
      %117 = vst.msk [vmem:[#allocation2 + $0x8] sm:$0xff] %vm115, 0.0
    $region17: #{tpu_custom_call.1} parent=1 // pred_fallthru
      _
    %v118 = vld [vmem:[%s82] sm:$0xff]
    %v119 = vld [vmem:[%s82 + $0x8] sm:$0xff]
    %vm120 = vcmask 261120
    %v121 = vsel %vm120, %v118, -inf
    %122 = vmax.xlane.f32.xlu0 %v121
    %v123 = vpop.xlane.xlu0 %122
    %v124 = vsel %vm120, %v119, -inf
    %125 = vmax.xlane.f32.xlu0 %v124
    %v126 = vpop.xlane.xlu0 %125
    %v127 = vsub.f32 %v118, %v123
    %v128 = vsub.f32 %v119, %v126
    %v129 = vmul.f32 %v127, 1.442695
    %v130 = vpow.pop %v129
    %v131 = vmul.f32 %v128, 1.442695
    %v132 = vpow.pop %v131
    %v133 = vsel %vm120, %v130, 0.0
    %134 = vadd.xlane.f32.xlu0 %v133
    %v135 = vpop.xlane.xlu0 %134
    %v136 = vsel %vm120, %v132, 0.0
    %137 = vadd.xlane.f32.xlu0 %v136
    %v138 = vpop.xlane.xlu0 %137
    %v139 = vlog2.pop %v135
    %v140 = vmul.f32 %v139, 0.6931472
    %v141 = vlog2.pop %v138
    %v142 = vmul.f32 %v141, 0.6931472
    %v143 = vld [vmem:[%s94] sm:$0xff]
    %v144 = vld [vmem:[%s94 + $0x8] sm:$0xff]
    %v145 = vlaneseq
    %v146 = vand.u32 %v145, 127
    %147 = vset.pattern.permute.xlu0 0
    %148 = vperm.xlu0 %147, %v143
    %v149 = vpop.permute.xlu0 %148
    %150 = vset.pattern.permute.xlu0 0
    %151 = vperm.xlu0 %150, %v144
    %v152 = vpop.permute.xlu0 %151
    %vm153 = vcmp.eq.s32.totalorder %v146, %v149
    %vm154 = vcmp.eq.s32.totalorder %v146, %v152
    %v155 = vsel %vm153, %v127, 0.0
    %v156 = vsel %vm154, %v128, 0.0
    %v157 = vsel %vm120, %v155, 0.0
    %158 = vadd.xlane.f32.xlu0 %v157
    %v159 = vpop.xlane.xlu0 %158
    %v160 = vsel %vm120, %v156, 0.0
    %161 = vadd.xlane.f32.xlu0 %v160
    %v162 = vpop.xlane.xlu0 %161
    %v163 = vsub.f32 %v159, %v140
    %v164 = vsub.f32 %v162, %v142
    %v165 = vmul.f32 %v163, 1.442695
    %v166 = vpow.pop %v165
    %v167 = vmul.f32 %v164, 1.442695
    %v168 = vpow.pop %v167
    %v169 = vsub.f32 1.0, %v166
    %v170 = vsub.f32 1.0, %v168
    %v171 = vmul.f32 %v169, %v169
    %v172 = vmul.f32 %v170, %v170
    %v173 = vld [vmem:[%s106] sm:$0xff]
    %v174 = vld [vmem:[%s106 + $0x8] sm:$0xff]
    %v175 = vsub.f32 0.0, %v173
    %v176 = vsub.f32 0.0, %v174
    %v177 = vmul.f32 %v175, %v171
    %v178 = vmul.f32 %v176, %v172
    %v179 = vmul.f32 %v177, %v163
    %v180 = vmul.f32 %v178, %v164
    %v181 = vld [vmem:[#allocation2] sm:$0xff]
    %v182 = vld [vmem:[#allocation2 + $0x8] sm:$0xff]
    %v183 = vadd.f32 %v181, %v179
    %v184 = vadd.f32 %v182, %v180
    %vm185 = vcmask 7168
    %186 = vst.msk [vmem:[#allocation2] sm:$0xff] %vm185, %v183
    %187 = vst.msk [vmem:[#allocation2 + $0x8] sm:$0xff] %vm185, %v184
    // Predicated region
    $region18: #{tpu_custom_call.1} parent=1 // pred_check
      %p188 = pneg %p111
    $region19: #{tpu_custom_call.1} parent=1 // pred_check_branch
      %190 = sbr.rel (%p188) target = $region21
    $region20: #{tpu_custom_call.1} parent=1 // pred_region
      %v191 = vld [vmem:[#allocation2] sm:$0xff]
      %v192 = vld [vmem:[#allocation2 + $0x8] sm:$0xff]
      %v193 = vsel %vm185, %v191, 0.0
      %v194 = vsel %vm185, %v192, 0.0
      %v195 = vadd.f32 %v193, %v194
      %196 = vadd.xlane.f32.xlu0 %v195
      %v197 = vpop.xlane.xlu0 %196
      %v198 = vrot.slane %v197, 4
      %v199 = vadd.f32 %v197, %v198
      %v200 = vrot.slane %v199, 2
      %v201 = vadd.f32 %v199, %v200
      %v202 = vrot.slane %v201, 1
      %v203 = vadd.f32 %v201, %v202
      %s204 = vtos %v203
      %v205 = vstv %s204
      %206 = vst [vmem:[#allocation3] sm:$0xff] %v205
    $region21: #{tpu_custom_call.1} parent=1 // pred_fallthru
      _
    // Predicated region
    $region22: #{tpu_custom_call.1} parent=1 // pred_check
      _
    $region23: #{tpu_custom_call.1} parent=1 // pred_check_branch
      %208 = sbr.rel (0) target = $region25
    $region24: #{tpu_custom_call.1} parent=1 // pred_region
      %s210 = ssub.s32 128, 128
      %211 = vsyncadd [#allocation4], %s210
      %s213 = sshll.u32 [#allocation3], 4
      %s214 = int_to_ptr.vmem [resolvable:$true] %s213
      %216 = dma.vmem_to_hbm [thread:$0]  %s214, 128, %s3, [#allocation4]
    $region25: #{tpu_custom_call.1} parent=1 // pred_fallthru
      _
    // Predicated region
    $region26: #{tpu_custom_call.1} parent=1 // pred_check
      _
    $region27: #{tpu_custom_call.1} parent=1 // pred_check_branch
      %218 = sbr.rel (0) target = $region29
    $region28: #{tpu_custom_call.1} parent=1 // pred_region
      %219 = dma.done [#allocation4], 128
    $region29: #{tpu_custom_call.1} parent=1 // pred_fallthru
      _
    %220 = vsyncpa [#allocation4], 1

</llo_original>
